<compile_context>
chip_gen: v7x
topology: tpu7x:2x2x1
jax: 0.10.0
libtpu: 0.0.40
codegen_flags: <defaults>
</compile_context>

<pallas_src>
import jax
import jax.numpy as jnp
from jax.experimental import pallas as pl
from jax.experimental.pallas import tpu as pltpu


def _mean_pooling_kernel(x_ref, mask_ref, denom_ref, o_ref, acc_ref):
    """One (batch-tile i, hidden-tile h, seq-tile k) grid step.

    x_ref:     (TB, TS, TH)   hidden-state tile (native dtype)
    mask_ref:  (TB, TS)       attention-mask tile
    denom_ref: (TB, 1) f32    precomputed clamp(sum(mask), 1e-9)
    o_ref:     (TB, TH)       output tile (resident across the k axis)
    acc_ref:   (TB, 1, TH) f32 accumulator kept in the MXU-native layout
    """
    k = pl.program_id(2)

    @pl.when(k == 0)
    def _init():
        acc_ref[...] = jnp.zeros_like(acc_ref)

    x = x_ref[...]                                    # (TB, TS, TH)
    m = mask_ref[...].astype(x.dtype)[:, None, :]     # (TB, 1, TS)

    # Masked sum over this sequence tile as a batched MXU matmul:
    #   (TB, 1, TS) @ (TB, TS, TH) -> (TB, 1, TH), accumulated in f32.
    acc_ref[...] += jax.lax.dot_general(
        m, x,
        dimension_numbers=(((2,), (1,)), ((0,), (0,))),
        preferred_element_type=jnp.float32,
    )

    @pl.when(k == pl.num_programs(2) - 1)
    def _finalize():
        inv = pl.reciprocal(denom_ref[...], approx=False)   # exact, (TB, 1)
        acc = acc_ref[...][:, 0, :]                          # single squeeze per tile
        o_ref[...] = (acc * inv).astype(o_ref.dtype)


def _vmem_capacity_bytes():
    """Per-core VMEM capacity; conservative (v7x) fallback if the query fails."""
    try:
        cap = getattr(pltpu.get_tpu_info(), "vmem_capacity_bytes", None)
        if cap:
            return int(cap)
    except Exception:
        pass
    return 64 * 1024 * 1024


def _round_up(x, m):
    return -(-x // m) * m


def _choose_tiles(B, S, H, itemsize, x_budget, tb, ts, th):
    """Pick (tb, ts, th, s_pad) respecting user overrides and the VMEM budget."""
    auto_tb = tb is None
    if auto_tb:
        tb = 8 if B % 8 == 0 else B
    assert B % tb == 0, "tb must divide B"

    # Hidden tile: keep H un-tiled (lane-dense output) unless even a minimal
    # (tb, min(S,128), H) block would blow the per-buffer budget.
    min_ts = min(S, 128)
    if th is None:
        th = H
        if tb * min_ts * H * itemsize > x_budget and H % 128 == 0:
            th = 128
            for cand in range(H, 127, -128):
                if H % cand == 0 and tb * min_ts * cand * itemsize <= x_budget:
                    th = cand
                    break
        # TODO(synk): if H is huge and not a multiple of 128 we keep th == H and
        # rely on vmem_limit_bytes; pad H in the wrapper if that ever trips.
    assert H % th == 0, "th must divide H"

    # Sequence (reduction) tile + padding decision.
    if ts is None:
        if tb * S * th * itemsize <= x_budget:
            ts = S
            s_pad = S
        else:
            s_pad = _round_up(S, 128)
            ts = 128
            for mult in range(s_pad // 128, 0, -1):
                cand = mult * 128
                if s_pad % cand == 0 and tb * cand * th * itemsize <= x_budget:
                    ts = cand
                    break
    else:
        s_pad = _round_up(S, ts)
        assert ts == s_pad or ts % 128 == 0, "explicit ts must be a multiple of 128"
    assert s_pad % ts == 0

    # When the whole (padded) sequence fits in one tile, spend leftover budget
    # on a bigger batch tile -- but keep grid[0] >= 2 so the parallel batch axis
    # can still shard across v7x's two TensorCores.
    if auto_tb and ts == s_pad:
        for cand in sorted((d for d in range(8, B + 1, 8) if B % d == 0),
                           reverse=True):
            if cand <= tb:
                break
            if B // cand >= 2 and cand * ts * th * itemsize <= x_budget:
                tb = cand
                break

    return tb, ts, th, s_pad


def mean_pooling(last_hidden_state, attention_mask, *, tb=None, ts=None, th=None):
    """Pallas implementation of MeanPooling.forward.

    last_hidden_state: [B, S, H] float array
    attention_mask:    [B, S]    int/float mask (1 = keep, 0 = pad)
    returns:           [B, H]    float32 masked mean over the sequence axis
    """
    B, S, H = last_hidden_state.shape
    assert attention_mask.shape == (B, S)
    itemsize = jnp.dtype(last_hidden_state.dtype).itemsize
    mask_itemsize = jnp.dtype(attention_mask.dtype).itemsize

    # Generation-aware VMEM budget: 128 MiB physical on v5e/v6e, 64 MiB per
    # TensorCore on v7x.  Leave headroom for mask/denom/output blocks, the
    # accumulator scratch and Mosaic's own scratch.
    vmem_cap = _vmem_capacity_bytes()
    vmem_limit = min((vmem_cap * 3) // 4, 96 * 1024 * 1024)   # 96 MiB v5e/v6e, 48 MiB v7x
    x_budget = min(vmem_limit // 3, 24 * 1024 * 1024)          # per double-buffered x tile

    tb, ts, th, s_pad = _choose_tiles(B, S, H, itemsize, x_budget, tb, ts, th)

    x = last_hidden_state
    mask = attention_mask
    if s_pad != S:
        # Zero padding of both x and the mask contributes 0 to the masked sum.
        x = jnp.pad(x, ((0, 0), (0, s_pad - S), (0, 0)))
        mask = jnp.pad(mask, ((0, 0), (0, s_pad - S)))

    # Precompute the clamped denominator once (torch.clamp(min=1e-9)); this is
    # only B*S ints of extra HBM traffic and removes a per-step XLU reduction.
    denom = jnp.maximum(
        jnp.sum(attention_mask.astype(jnp.float32), axis=1, keepdims=True), 1e-9)

    grid = (B // tb, H // th, s_pad // ts)

    cost = pl.CostEstimate(
        flops=2 * B * s_pad * H,
        transcendentals=0,
        bytes_accessed=(B * s_pad * H * itemsize
                        + (H // th) * B * s_pad * mask_itemsize
                        + B * H * 4 + B * 4),
    )

    return pl.pallas_call(
        _mean_pooling_kernel,
        out_shape=jax.ShapeDtypeStruct((B, H), jnp.float32),
        grid_spec=pltpu.PrefetchScalarGridSpec(
            num_scalar_prefetch=0,
            grid=grid,
            in_specs=[
                pl.BlockSpec((tb, ts, th), lambda i, h, k: (i, k, h)),
                pl.BlockSpec((tb, ts), lambda i, h, k: (i, k)),
                pl.BlockSpec((tb, 1), lambda i, h, k: (i, 0)),
            ],
            out_specs=pl.BlockSpec((tb, th), lambda i, h, k: (i, h)),
            scratch_shapes=[pltpu.VMEM((tb, 1, th), jnp.float32)],
        ),
        compiler_params=pltpu.CompilerParams(
            dimension_semantics=("parallel", "parallel", "arbitrary"),
            vmem_limit_bytes=vmem_limit,
        ),
        cost_estimate=cost,
    )(x, mask, denom)


def mean_pooling_ref(last_hidden_state, attention_mask):
    """Pure-JAX reference matching the PyTorch module exactly."""
    m = attention_mask[:, :, None].astype(jnp.float32)
    sum_emb = jnp.sum(last_hidden_state.astype(jnp.float32) * m, axis=1)
    sum_mask = jnp.maximum(jnp.sum(m, axis=1), 1e-9)  # torch.clamp(min=1e-9)
    return sum_emb / sum_mask


if __name__ == "__main__":
    key = jax.random.PRNGKey(0)
    k1, k2, k3, k4, k5 = jax.random.split(key, 5)

    # --- Test 1: small shape consistent with the module (B=2, S=8, H=32) ----
    B, S, H = 2, 8, 32
    last_hidden_state = jax.random.normal(k1, (B, S, H), dtype=jnp.float32)
    lengths = jnp.array([5, 8], dtype=jnp.int32)
    attention_mask = (jnp.arange(S)[None, :] < lengths[:, None]).astype(jnp.int32)

    out = jax.block_until_ready(mean_pooling(last_hidden_state, attention_mask))
    ref = mean_pooling_ref(last_hidden_state, attention_mask)
    assert out.shape == (B, H)
    assert jnp.allclose(out, ref, atol=1e-5, rtol=1e-5)

    # --- Test 2: exercise batch-parallel + sequence-reduction grid axes -----
    B2, S2, H2 = 16, 256, 128
    x2 = jax.random.normal(k2, (B2, S2, H2), dtype=jnp.float32)
    lens2 = jax.random.randint(k3, (B2,), 1, S2 + 1)
    mask2 = (jnp.arange(S2)[None, :] < lens2[:, None]).astype(jnp.int32)

    out2 = jax.block_until_ready(mean_pooling(x2, mask2, tb=8, ts=128))  # grid (2,1,2)
    ref2 = mean_pooling_ref(x2, mask2)
    assert out2.shape == (B2, H2)
    assert jnp.allclose(out2, ref2, atol=1e-3, rtol=1e-3)

    # --- Test 3: hidden tiling + ragged S (padding path), grid (1, 2, 2) ----
    B3, S3, H3 = 8, 200, 256
    x3 = jax.random.normal(k4, (B3, S3, H3), dtype=jnp.float32)
    lens3 = jax.random.randint(k5, (B3,), 1, S3 + 1)
    mask3 = (jnp.arange(S3)[None, :] < lens3[:, None]).astype(jnp.int32)

    out3 = jax.block_until_ready(mean_pooling(x3, mask3, ts=128, th=128))
    ref3 = mean_pooling_ref(x3, mask3)
    assert out3.shape == (B3, H3)
    assert jnp.allclose(out3, ref3, atol=1e-3, rtol=1e-3)

    print("KERNEL_OK")
</pallas_src>

<mosaic_0001>
module attributes {stable_mosaic.version = 11 : i64} {
  func.func @_mean_pooling_kernel(%arg0: i32, %arg1: i32, %arg2: i32, %arg3: memref<2x8x32xf32, #tpu.memory_space<vmem>>, %arg4: memref<2x8xi32, #tpu.memory_space<vmem>>, %arg5: memref<2x1xf32, #tpu.memory_space<vmem>>, %arg6: memref<2x32xf32, #tpu.memory_space<vmem>>, %arg7: memref<2x1x32xf32, #tpu.memory_space<vmem>>) attributes {dimension_semantics = [#tpu.dimension_semantics<parallel>, #tpu.dimension_semantics<parallel>, #tpu.dimension_semantics<arbitrary>], iteration_bounds = array<i64: 1, 1, 1>, scalar_prefetch = 0 : i64, scratch_operands = 1 : i64, tpu.core_type = #tpu.core_type<tc>, window_params = [{transform_indices = @transform_0, window_bounds = array<i64: 2, 8, 32>}, {transform_indices = @transform_1, window_bounds = array<i64: 2, 8>}, {transform_indices = @transform_2, window_bounds = array<i64: 2, 1>}, {transform_indices = @transform_3, window_bounds = array<i64: 2, 32>}]} {
    %c0_i32 = arith.constant 0 : i32
    %0 = arith.cmpi eq, %arg2, %c0_i32 : i32
    %1 = arith.extui %0 : i1 to i32
    %c0_i32_0 = arith.constant 0 : i32
    %2 = arith.cmpi ne, %1, %c0_i32_0 : i32
    scf.if %2 {
      %cst_13 = arith.constant 0.000000e+00 : f32
      %14 = vector.broadcast %cst_13 : f32 to vector<2x1x32xf32>
      %c0_14 = arith.constant 0 : index
      %c0_15 = arith.constant 0 : index
      %c0_16 = arith.constant 0 : index
      %15 = vector.load %arg7[%c0_14, %c0_15, %c0_16] : memref<2x1x32xf32, #tpu.memory_space<vmem>>, vector<2x1x32xf32>
      tpu.vector_store %arg7[%c0_14, %c0_15, %c0_16], %14 {strides = array<i32>} : memref<2x1x32xf32, #tpu.memory_space<vmem>>, vector<2x1x32xf32>,
    } else {
    }
    %c0 = arith.constant 0 : index
    %c0_1 = arith.constant 0 : index
    %c0_2 = arith.constant 0 : index
    %3 = vector.load %arg3[%c0, %c0_1, %c0_2] : memref<2x8x32xf32, #tpu.memory_space<vmem>>, vector<2x8x32xf32>
    %c0_3 = arith.constant 0 : index
    %c0_4 = arith.constant 0 : index
    %4 = vector.load %arg4[%c0_3, %c0_4] : memref<2x8xi32, #tpu.memory_space<vmem>>, vector<2x8xi32>
    %5 = arith.sitofp %4 : vector<2x8xi32> to vector<2x8xf32>
    %6 = vector.shape_cast %5 : vector<2x8xf32> to vector<2x1x8xf32>
    %c0_5 = arith.constant 0 : index
    %c0_6 = arith.constant 0 : index
    %c0_7 = arith.constant 0 : index
    %7 = vector.load %arg7[%c0_5, %c0_6, %c0_7] : memref<2x1x32xf32, #tpu.memory_space<vmem>>, vector<2x1x32xf32>
    %cst = arith.constant dense<0.000000e+00> : vector<2x1x32xf32>
    %8 = tpu.matmul %6, %3, %cst {dimension_numbers = #tpu.dot_dimension_numbers<[2], [1], [1], [2], [0, 0, 0, 1, 1, 2], [0], [0]>} : vector<2x1x8xf32>, vector<2x8x32xf32>, vector<2x1x32xf32> -> vector<2x1x32xf32>
    %9 = arith.addf %7, %8 : vector<2x1x32xf32>
    %c0_8 = arith.constant 0 : index
    %c0_9 = arith.constant 0 : index
    %c0_10 = arith.constant 0 : index
    %10 = vector.load %arg7[%c0_8, %c0_9, %c0_10] : memref<2x1x32xf32, #tpu.memory_space<vmem>>, vector<2x1x32xf32>
    tpu.vector_store %arg7[%c0_8, %c0_9, %c0_10], %9 {strides = array<i32>} : memref<2x1x32xf32, #tpu.memory_space<vmem>>, vector<2x1x32xf32>,
    %c0_i32_11 = arith.constant 0 : i32
    %11 = arith.cmpi eq, %arg2, %c0_i32_11 : i32
    %12 = arith.extui %11 : i1 to i32
    %c0_i32_12 = arith.constant 0 : i32
    %13 = arith.cmpi ne, %12, %c0_i32_12 : i32
    scf.if %13 {
      %c0_13 = arith.constant 0 : index
      %c0_14 = arith.constant 0 : index
      %14 = vector.load %arg5[%c0_13, %c0_14] : memref<2x1xf32, #tpu.memory_space<vmem>>, vector<2x1xf32>
      %15 = tpu.reciprocal %14 : vector<2x1xf32> -> vector<2x1xf32>
      %c0_15 = arith.constant 0 : index
      %c0_16 = arith.constant 0 : index
      %c0_17 = arith.constant 0 : index
      %16 = vector.load %arg7[%c0_15, %c0_16, %c0_17] : memref<2x1x32xf32, #tpu.memory_space<vmem>>, vector<2x1x32xf32>
      %17 = vector.shape_cast %16 : vector<2x1x32xf32> to vector<2x32xf32>
      %18 = vector.broadcast %15 : vector<2x1xf32> to vector<2x32xf32>
      %19 = arith.mulf %17, %18 : vector<2x32xf32>
      %c0_18 = arith.constant 0 : index
      %c0_19 = arith.constant 0 : index
      %20 = vector.load %arg6[%c0_18, %c0_19] : memref<2x32xf32, #tpu.memory_space<vmem>>, vector<2x32xf32>
      tpu.vector_store %arg6[%c0_18, %c0_19], %19 {strides = array<i32>} : memref<2x32xf32, #tpu.memory_space<vmem>>, vector<2x32xf32>,
    } else {
    }
    return
  }
  func.func @transform_0(%arg0: i32, %arg1: i32, %arg2: i32) -> (i32, i32, i32) {
    %c0_i32 = arith.constant 0 : i32
    return %arg0, %arg2, %arg1 : i32, i32, i32
  }
  func.func @transform_1(%arg0: i32, %arg1: i32, %arg2: i32) -> (i32, i32) {
    %c0_i32 = arith.constant 0 : i32
    return %arg0, %arg2 : i32, i32
  }
  func.func @transform_2(%arg0: i32, %arg1: i32, %arg2: i32) -> (i32, i32) {
    %c0_i32 = arith.constant 0 : i32
    %c0_i32_0 = arith.constant 0 : i32
    return %arg0, %c0_i32 : i32, i32
  }
  func.func @transform_3(%arg0: i32, %arg1: i32, %arg2: i32) -> (i32, i32) {
    %c0_i32 = arith.constant 0 : i32
    return %arg0, %arg1 : i32, i32
  }
}

</mosaic_0001>

<llo_original>
// kernel: tpu_custom_call.1
$region0: #{tpu_custom_call.1}
  #allocation0 [shape = 'u32[]', space=smem, size = 0x4, offset = 0x4, fixed_abs, tag = 'smem constant byte address 0x4 - core index']
  #allocation1 [shape = 'u32[144,128]{1,0:T(1,128)}', space=vmem, size = 0x12000, scoped, tag = 'internal scratch']
  #allocation2 [shape = 'f32[2,1,32]{2,1,0:T(1,128)}', space=vmem, size = 0x400, scoped, tag = 'scratch operand']
  %s0 = inlined_call_operand.hbm [shape: f32[2,8,32], index: 0, kind: input, shape index: {}]
  %s1 = inlined_call_operand.vmem [shape: s32[2,8], index: 1, kind: input, shape index: {}]
  %s2 = inlined_call_operand.vmem [shape: f32[2,1], index: 2, kind: input, shape index: {}]
  %s3 = inlined_call_operand.hbm [shape: f32[2,32], index: 3, kind: output, shape index: {}]
  %s4 = sld [smem:[#allocation0]]
  $region34: #{tpu_custom_call.1} parent=0
    _
  %s6 = ssub.s32 1, %s4
  %s7 = scalar_select 0, %s6, %s4
  $region1: #{tpu_custom_call.1} parent=0
    #allocation3 [shape = 'u8[8192]{0}', space=vmem, size = 0x2000, scoped, tag = 'input window, operand 0, single buffered']
    #allocation4 [shape = 's32[1]{0}', space=sflag, size = 0x4, scoped, tag = 'scoped memory for tpu_custom_call.1']
    #allocation5 [shape = 's32[1]{0}', space=sflag, size = 0x4, scoped, tag = 'scoped memory for tpu_custom_call.1']
    #allocation6 [shape = 'u8[1024]{0}', space=vmem, size = 0x400, scoped, tag = 'output window, operand 0, single buffered']
    %8 = vsyncpa [#allocation4], 0
    %9 = vsyncpa [#allocation5], 0
    // Predicated region
    $region2: #{tpu_custom_call.1} parent=1 // pred_check
      _
    $region3: #{tpu_custom_call.1} parent=1 // pred_check_branch
      %11 = sbr.rel (0) target = $region5
    $region4: #{tpu_custom_call.1} parent=1 // pred_region
      %s13 = ssub.s32 256, 256
      %14 = vsyncadd [#allocation4], %s13
      %s15 = sshll.u32 [#allocation3], 4
      %s16 = int_to_ptr.vmem [resolvable:$true] %s15
      %21 = dma.hbm_to_vmem [thread:$0]  %s0, 256, %s16, [#allocation4], 128, 128, 8
    $region5: #{tpu_custom_call.1} parent=1 // pred_fallthru
      _
    // Predicated region
    $region6: #{tpu_custom_call.1} parent=1 // pred_check
      _
    $region7: #{tpu_custom_call.1} parent=1 // pred_check_branch
      %23 = sbr.rel (0) target = $region9
    $region8: #{tpu_custom_call.1} parent=1 // pred_region
      _
    $region9: #{tpu_custom_call.1} parent=1 // pred_fallthru
      _
    // Predicated region
    $region10: #{tpu_custom_call.1} parent=1 // pred_check
      _
    $region11: #{tpu_custom_call.1} parent=1 // pred_check_branch
      %25 = sbr.rel (0) target = $region13
    $region12: #{tpu_custom_call.1} parent=1 // pred_region
      _
    $region13: #{tpu_custom_call.1} parent=1 // pred_fallthru
      _
    // Predicated region
    $region14: #{tpu_custom_call.1} parent=1 // pred_check
      _
    $region15: #{tpu_custom_call.1} parent=1 // pred_check_branch
      %27 = sbr.rel (0) target = $region17
    $region16: #{tpu_custom_call.1} parent=1 // pred_region
      %28 = dma.done [#allocation4], 256
    $region17: #{tpu_custom_call.1} parent=1 // pred_fallthru
      _
    %p29 = scmp.eq.s32.totalorder 0, 0
    // Predicated region
    $region18: #{tpu_custom_call.1} parent=1 // pred_check
      %p30 = pneg %p29
    $region19: #{tpu_custom_call.1} parent=1 // pred_check_branch
      %32 = sbr.rel (%p30) target = $region21
    $region20: #{tpu_custom_call.1} parent=1 // pred_region
      %vm33 = vcmask 253952
      %34 = vst.msk [vmem:[#allocation2] sm:$0x1] %vm33, 0.0
      %35 = vst.msk [vmem:[#allocation2 + $0x1] sm:$0x1] %vm33, 0.0
    $region21: #{tpu_custom_call.1} parent=1 // pred_fallthru
      _
    %v36 = vld [vmem:[#allocation3] sm:$0xff]
    %v37 = vld [vmem:[#allocation3 + $0x8] sm:$0xff]
    %v38 = vld [vmem:[%s1] sm:$0x3]
    %v39 = vcvt.s32.f32 %v38
    %v42 = vunpack.c.l.s4 1966171168
    %v43 = vunpack.c.0.s8 %v42
    %v44 = vlaneseq
    %v45 = vshrl.u32 %v44, 7
    %v46 = vsub.s32 %v43, %v45
    %v47 = vrot.slane %v39, %v46
    %v48 = vcombine.high %v47, %v47
    %v50 = vunpack.c.l.s4 1966171168
    %v51 = vunpack.c.0.s8 %v50
    %v52 = vlaneseq
    %v53 = vshrl.u32 %v52, 7
    %v54 = vsub.s32 %v51, %v53
    %v55 = vrot.slane %v47, %v54
    %v57 = vunpack.c.l.s4 1966171168
    %v58 = vunpack.c.0.s8 %v57
    %v59 = vlaneseq
    %v60 = vshrl.u32 %v59, 7
    %v61 = vsub.s32 %v58, %v60
    %v62 = vrot.slane %v48, %v61
    %v63 = vld [vmem:[#allocation2] sm:$0x1]
    %v64 = vld [vmem:[#allocation2 + $0x1] sm:$0x1]
    %vm65 = vcmask 64512
    %v66 = vsel %vm65, %v55, 0
    %68 = vmatprep.subr.mxu0 0.0
    %69 = vmatpush1.msra.mxu0 %v36
    %70 = vmatprep.subr.mxu0 0.0
    %71 = vmatpush1.msra.mxu0 0.0
    %72 = vmatprep.subr.mxu0 0.0
    %73 = vmatpush1.msra.mxu0 0.0
    %74 = vmatprep.subr.mxu0 0.0
    %75 = vmatpush1.msra.mxu0 0.0
    %76 = vmatprep.subr.mxu0 0.0
    %77 = vmatpush1.msra.mxu0 0.0
    %78 = vmatprep.subr.mxu0 0.0
    %79 = vmatpush1.msra.mxu0 0.0
    %80 = vmatprep.subr.mxu0 0.0
    %81 = vmatpush1.msra.mxu0 0.0
    %82 = vmatprep.subr.mxu0 0.0
    %83 = vmatpush1.msra.mxu0 0.0
    %84 = vmatprep.subr.mxu0 0.0
    %85 = vmatpush1.msra.mxu0 0.0
    %86 = vmatprep.subr.mxu0 0.0
    %87 = vmatpush1.msra.mxu0 0.0
    %88 = vmatprep.subr.mxu0 0.0
    %89 = vmatpush1.msra.mxu0 0.0
    %90 = vmatprep.subr.mxu0 0.0
    %91 = vmatpush1.msra.mxu0 0.0
    %92 = vmatprep.subr.mxu0 0.0
    %93 = vmatpush1.msra.mxu0 0.0
    %94 = vmatprep.subr.mxu0 0.0
    %95 = vmatpush1.msra.mxu0 0.0
    %96 = vmatprep.subr.mxu0 0.0
    %97 = vmatpush1.msra.mxu0 0.0
    %98 = vmatprep.subr.mxu0 0.0
    %99 = vmatpush1.msra.mxu0 0.0
    %100 = vmatprep.subr.mxu0 0.0
    %101 = vmatpush1.msra.mxu0 0.0
    %102 = vmatprep.subr.mxu0 0.0
    %103 = vmatpush1.msra.mxu0 0.0
    %104 = vmatprep.subr.mxu0 0.0
    %105 = vmatpush1.msra.mxu0 0.0
    %106 = vmatprep.subr.mxu0 0.0
    %107 = vmatpush1.msra.mxu0 0.0
    %108 = vmatprep.subr.mxu0 0.0
    %109 = vmatpush1.msra.mxu0 0.0
    %110 = vmatprep.subr.mxu0 0.0
    %111 = vmatpush1.msra.mxu0 0.0
    %112 = vmatprep.subr.mxu0 0.0
    %113 = vmatpush1.msra.mxu0 0.0
    %114 = vmatprep.subr.mxu0 0.0
    %115 = vmatpush1.msra.mxu0 0.0
    %116 = vmatprep.subr.mxu0 0.0
    %117 = vmatpush1.msra.mxu0 0.0
    %118 = vmatprep.subr.mxu0 0.0
    %119 = vmatpush1.msra.mxu0 0.0
    %120 = vmatprep.subr.mxu0 0.0
    %121 = vmatpush1.msra.mxu0 0.0
    %122 = vmatprep.subr.mxu0 0.0
    %123 = vmatpush1.msra.mxu0 0.0
    %124 = vmatprep.subr.mxu0 0.0
    %125 = vmatpush1.msra.mxu0 0.0
    %126 = vmatprep.subr.mxu0 0.0
    %127 = vmatpush1.msra.mxu0 0.0
    %128 = vmatprep.subr.mxu0 0.0
    %129 = vmatpush1.msra.mxu0 0.0
    %130 = vmatprep.subr.mxu0 0.0
    %131 = vmatpush1.msra.mxu0 0.0
    %132 = vmatprep.mubr.f32.mxu0 0.0
    %133 = vmatmul.mubr.f32.gmra.mrb[0].mxu0 %v66
    %v134 = vpop.f32.mrb[0].mxu0
    %v135 = vadd.f32 0.0, %v134
    %v136 = vpop.f32.mrb[0].mxu0
    %137 = vdwg.mxu0
    %v138 = vsel %vm65, %v62, 0
    %140 = vmatprep.subr.mxu0 0.0
    %141 = vmatpush1.msra.mxu0 %v37
    %142 = vmatprep.subr.mxu0 0.0
    %143 = vmatpush1.msra.mxu0 0.0
    %144 = vmatprep.subr.mxu0 0.0
    %145 = vmatpush1.msra.mxu0 0.0
    %146 = vmatprep.subr.mxu0 0.0
    %147 = vmatpush1.msra.mxu0 0.0
    %148 = vmatprep.subr.mxu0 0.0
    %149 = vmatpush1.msra.mxu0 0.0
    %150 = vmatprep.subr.mxu0 0.0
    %151 = vmatpush1.msra.mxu0 0.0
    %152 = vmatprep.subr.mxu0 0.0
    %153 = vmatpush1.msra.mxu0 0.0
    %154 = vmatprep.subr.mxu0 0.0
    %155 = vmatpush1.msra.mxu0 0.0
    %156 = vmatprep.subr.mxu0 0.0
    %157 = vmatpush1.msra.mxu0 0.0
    %158 = vmatprep.subr.mxu0 0.0
    %159 = vmatpush1.msra.mxu0 0.0
    %160 = vmatprep.subr.mxu0 0.0
    %161 = vmatpush1.msra.mxu0 0.0
    %162 = vmatprep.subr.mxu0 0.0
    %163 = vmatpush1.msra.mxu0 0.0
    %164 = vmatprep.subr.mxu0 0.0
    %165 = vmatpush1.msra.mxu0 0.0
    %166 = vmatprep.subr.mxu0 0.0
    %167 = vmatpush1.msra.mxu0 0.0
    %168 = vmatprep.subr.mxu0 0.0
    %169 = vmatpush1.msra.mxu0 0.0
    %170 = vmatprep.subr.mxu0 0.0
    %171 = vmatpush1.msra.mxu0 0.0
    %172 = vmatprep.subr.mxu0 0.0
    %173 = vmatpush1.msra.mxu0 0.0
    %174 = vmatprep.subr.mxu0 0.0
    %175 = vmatpush1.msra.mxu0 0.0
    %176 = vmatprep.subr.mxu0 0.0
    %177 = vmatpush1.msra.mxu0 0.0
    %178 = vmatprep.subr.mxu0 0.0
    %179 = vmatpush1.msra.mxu0 0.0
    %180 = vmatprep.subr.mxu0 0.0
    %181 = vmatpush1.msra.mxu0 0.0
    %182 = vmatprep.subr.mxu0 0.0
    %183 = vmatpush1.msra.mxu0 0.0
    %184 = vmatprep.subr.mxu0 0.0
    %185 = vmatpush1.msra.mxu0 0.0
    %186 = vmatprep.subr.mxu0 0.0
    %187 = vmatpush1.msra.mxu0 0.0
    %188 = vmatprep.subr.mxu0 0.0
    %189 = vmatpush1.msra.mxu0 0.0
    %190 = vmatprep.subr.mxu0 0.0
    %191 = vmatpush1.msra.mxu0 0.0
    %192 = vmatprep.subr.mxu0 0.0
    %193 = vmatpush1.msra.mxu0 0.0
    %194 = vmatprep.subr.mxu0 0.0
    %195 = vmatpush1.msra.mxu0 0.0
    %196 = vmatprep.subr.mxu0 0.0
    %197 = vmatpush1.msra.mxu0 0.0
    %198 = vmatprep.subr.mxu0 0.0
    %199 = vmatpush1.msra.mxu0 0.0
    %200 = vmatprep.subr.mxu0 0.0
    %201 = vmatpush1.msra.mxu0 0.0
    %202 = vmatprep.subr.mxu0 0.0
    %203 = vmatpush1.msra.mxu0 0.0
    %204 = vmatprep.mubr.f32.mxu0 0.0
    %205 = vmatmul.mubr.f32.gmra.mrb[0].mxu0 %v138
    %v206 = vpop.f32.mrb[0].mxu0
    %v207 = vadd.f32 0.0, %v206
    %v208 = vpop.f32.mrb[0].mxu0
    %209 = vdwg.mxu0
    %v210 = vadd.f32 %v63, %v135
    %v211 = vadd.f32 %v64, %v207
    %vm212 = vcmask 253952
    %213 = vst.msk [vmem:[#allocation2] sm:$0x1] %vm212, %v210
    %214 = vst.msk [vmem:[#allocation2 + $0x1] sm:$0x1] %vm212, %v211
    // Predicated region
    $region22: #{tpu_custom_call.1} parent=1 // pred_check
      %p215 = pneg %p29
    $region23: #{tpu_custom_call.1} parent=1 // pred_check_branch
      %217 = sbr.rel (%p215) target = $region25
    $region24: #{tpu_custom_call.1} parent=1 // pred_region
      %v218 = vld [vmem:[%s2] sm:$0x3]
      %v219 = vrcp.pop %v218
      %v220 = vld [vmem:[#allocation2] sm:$0x1]
      %v221 = vld [vmem:[#allocation2 + $0x1] sm:$0x1]
      %223 = vset.pattern.permute.xlu0 0
      %224 = vperm.xlu0 %223, %v219
      %v225 = vpop.permute.xlu0 %224
      %v226 = vlaneseq
      %v227 = vshrl.u32 %v226, 7
      %v228 = vsub.s32 0, %v227
      %v229 = vrot.slane %v225, %v228
      %v230 = vlaneseq
      %v231 = vshrl.u32 %v230, 7
      %v232 = vsub.s32 1, %v231
      %v233 = vrot.slane %v225, %v232
      %v236 = vmul.f32 %v220, %v229
      %v237 = vmul.f32 %v221, %v233
      %v240 = vcombine.low %v236, %v237
      %v242 = vunpack.c.l.s4 1966171168
      %v243 = vunpack.c.0.s8 %v242
      %v244 = vlaneseq
      %v245 = vshrl.u32 %v244, 7
      %v246 = vsub.s32 %v243, %v245
      %v247 = vrot.slane %v240, %v246
      %v249 = vunpack.c.l.s4 1966171168
      %v250 = vunpack.c.0.s8 %v249
      %v251 = vlaneseq
      %v252 = vshrl.u32 %v251, 7
      %v253 = vsub.s32 %v250, %v252
      %v254 = vrot.slane %v247, %v253
      %vm256 = vcmask 254976
      %257 = vst.msk [vmem:[#allocation6] sm:$0x3] %vm256, %v254
    $region25: #{tpu_custom_call.1} parent=1 // pred_fallthru
      _
    // Predicated region
    $region26: #{tpu_custom_call.1} parent=1 // pred_check
      _
    $region27: #{tpu_custom_call.1} parent=1 // pred_check_branch
      %259 = sbr.rel (0) target = $region29
    $region28: #{tpu_custom_call.1} parent=1 // pred_region
      %s261 = ssub.s32 32, 32
      %262 = vsyncadd [#allocation5], %s261
      %s264 = sshll.u32 [#allocation6], 4
      %s265 = int_to_ptr.vmem [resolvable:$true] %s264
      %267 = dma.vmem_to_hbm [thread:$0]  %s265, 32, %s3, [#allocation5]
    $region29: #{tpu_custom_call.1} parent=1 // pred_fallthru
      _
    // Predicated region
    $region30: #{tpu_custom_call.1} parent=1 // pred_check
      _
    $region31: #{tpu_custom_call.1} parent=1 // pred_check_branch
      %269 = sbr.rel (0) target = $region33
    $region32: #{tpu_custom_call.1} parent=1 // pred_region
      %270 = dma.done [#allocation5], 32
    $region33: #{tpu_custom_call.1} parent=1 // pred_fallthru
      _
    %271 = vsyncpa [#allocation4], 1
    %272 = vsyncpa [#allocation5], 1

</llo_original>
